<compile_context>
chip_gen: v7x
topology: tpu7x:2x2x1
jax: 0.10.0
libtpu: 0.0.40
codegen_flags: <defaults>
</compile_context>

<pallas_src>
import functools

import jax
import jax.numpy as jnp
from jax import lax
from jax.experimental import pallas as pl
from jax.experimental.pallas import tpu as pltpu


STAT_LANES = 128  # lane-dense accumulator row; only lanes 0..4 carry data:
#   lane 0: sum g           (target volume per class)
#   lane 1: sum p * g       (true positives / intersection)
#   lane 2: sum p           (softmax probability mass per class)
#   lane 3: sum CE          (tile-total cross-entropy, same value in every class row)
#   lane 4: sum (p > 0.5)   (binarized prediction voxel count per class)


# --------------------------------------------------------------------------- #
# Pallas kernel
# --------------------------------------------------------------------------- #
def _stats_kernel(pred_ref, tgt_ref, stats_ref, *, tile_s, tiles_per_split,
                  total_s, last_tile, ragged):
    """Accumulate per-(batch, class) spatial statistics for one spatial tile.

    pred_ref : (1, C, TS)  logits (f32 or bf16; cast to f32 after the VMEM load)
    tgt_ref  : (1, 1, TS)  integer class indices
    stats_ref: (1, C, STAT_LANES) f32 accumulator, resident across the spatial
               ("arbitrary") grid axis.
    """
    n = pl.program_id(1)
    s = pl.program_id(2)

    @pl.when(s == 0)
    def _init():
        stats_ref[...] = jnp.zeros_like(stats_ref)

    def accumulate(masked):
        logits = pred_ref[...].astype(jnp.float32)          # (1, C, TS)
        C = logits.shape[1]
        TS = logits.shape[2]
        tgt = tgt_ref[...].astype(jnp.int32)                # (1, 1, TS)

        if masked:
            # Only the final (ragged) tile runs this branch.  Build the validity
            # mask from the global voxel index and sanitise the tail BEFORE
            # exp/max so out-of-bounds garbage cannot produce NaN/Inf.
            lane = lax.broadcasted_iota(jnp.int32, (1, 1, TS), 2)
            start = (n * tiles_per_split + s) * tile_s
            valid = (start + lane) < total_s                # (1, 1, TS) bool
            logits = jnp.where(valid, logits, 0.0)
            tgt = jnp.where(valid, tgt, -1)                 # pad -> no class

        # Channel softmax pieces (channel axis = sublanes).
        m = jnp.max(logits, axis=1, keepdims=True)          # (1, 1, TS)
        e = jnp.exp(logits - m)                             # (1, C, TS)
        denom = jnp.sum(e, axis=1, keepdims=True)           # (1, 1, TS)
        inv_denom = pl.reciprocal(denom, approx=True)       # EUP, off the VPU
        p = e * inv_denom                                   # softmax probabilities
        if masked:
            p = jnp.where(valid, p, 0.0)                    # padded voxels drop out

        # One-hot from a tiny (1, C, 1) iota broadcast against (1, 1, TS) labels;
        # stays boolean, selects replace the full f32 one-hot multiplies.
        c_iota = lax.broadcasted_iota(jnp.int32, (1, C, 1), 1)
        g = c_iota == tgt                                   # (1, C, TS) bool
        g_f = g.astype(jnp.float32)                         # needed once, for vol

        vol_g = jnp.sum(g_f, axis=2, keepdims=True)                        # (1, C, 1)
        tp = jnp.sum(jnp.where(g, p, 0.0), axis=2, keepdims=True)          # (1, C, 1)
        sum_p = jnp.sum(p, axis=2, keepdims=True)                          # (1, C, 1)
        cnt = jnp.sum((p > 0.5).astype(jnp.float32), axis=2, keepdims=True)

        # Cross-entropy: per voxel CE = logsumexp(logits) - logit[target]; only
        # the total is needed downstream (no log-softmax materialisation).
        lse = m + jnp.log(denom)                                           # (1, 1, TS)
        tgt_logit = jnp.sum(jnp.where(g, logits, 0.0), axis=1, keepdims=True)
        ce_vox = lse - tgt_logit
        if masked:
            ce_vox = jnp.where(valid, ce_vox, 0.0)
        ce_total = jnp.sum(ce_vox, axis=2, keepdims=True)                  # (1, 1, 1)

        # Scatter into the lanes of the (1, C, 128) accumulator.
        col = lax.broadcasted_iota(jnp.int32, (1, 1, STAT_LANES), 2)
        partial = (jnp.where(col == 0, vol_g, 0.0)
                   + jnp.where(col == 1, tp, 0.0)
                   + jnp.where(col == 2, sum_p, 0.0)
                   + jnp.where(col == 3, ce_total, 0.0)
                   + jnp.where(col == 4, cnt, 0.0))
        stats_ref[...] += partial

    if ragged:
        global_tile = n * tiles_per_split + s
        # Mask is paid only on the single tail tile; all other tiles take the
        # unmasked branch at runtime (pl.when -> scf.if).
        @pl.when(global_tile != last_tile)
        def _full():
            accumulate(False)

        @pl.when(global_tile == last_tile)
        def _tail():
            accumulate(True)
    else:
        accumulate(False)


# --------------------------------------------------------------------------- #
# Planning helpers
# --------------------------------------------------------------------------- #
def _vmem_capacity_bytes(default=64 << 20):
    """Generation-aware VMEM capacity (falls back to a conservative 64 MiB)."""
    try:
        return int(pltpu.get_tpu_info().vmem_capacity_bytes)
    except Exception:
        return default


def _tensorcores_per_chip():
    """Best-effort TensorCore-per-chip detection (defaults to 1 on failure)."""
    try:
        info = pltpu.get_tpu_info()
        for attr in ("num_cores", "tensorcores_per_chip", "cores_per_chip",
                     "num_tensorcores", "core_count"):
            v = getattr(info, attr, None)
            if isinstance(v, int) and v > 0:
                return v
    except Exception:
        pass
    try:
        kind = jax.devices()[0].device_kind.lower()
        if ("v4" in kind) or ("v5p" in kind) or ("v7" in kind):
            return 2
    except Exception:
        pass
    return 1


def _plan_spatial(S, lane_cap, min_exact=1024):
    """Pick tile_s (multiple of 128, <= lane_cap).

    Prefer a tile that divides S exactly (no ragged tail at all); otherwise use
    the full lane_cap and let only the final tile be ragged (masked in-kernel).
    No wrapper-side padding copy is ever made."""
    lane_cap = max(128, (lane_cap // 128) * 128)
    if S <= lane_cap:
        return pl.cdiv(S, 128) * 128          # one (possibly ragged) tile
    if S % 128 == 0:
        floor_t = max(128, min(min_exact, lane_cap))
        t = lane_cap
        while t >= floor_t:
            if S % t == 0:
                return t
            t -= 128
    return lane_cap                            # ragged tail, masked only there


def _compute_stats(pred_bcs, tgt_b1s, *, tile_s, nsplit, total_s, vmem_limit):
    B, C, _ = pred_bcs.shape
    num_tiles = pl.cdiv(total_s, tile_s)
    assert num_tiles % nsplit == 0
    tiles_per_split = num_tiles // nsplit
    ragged = (num_tiles * tile_s != total_s)
    grid = (B, nsplit, tiles_per_split)

    kernel = functools.partial(
        _stats_kernel, tile_s=tile_s, tiles_per_split=tiles_per_split,
        total_s=total_s, last_tile=num_tiles - 1, ragged=ragged)

    pred_bytes = jnp.dtype(pred_bcs.dtype).itemsize
    tgt_bytes = jnp.dtype(tgt_b1s.dtype).itemsize
    cost = pl.CostEstimate(
        flops=int(12 * B * C * total_s),
        transcendentals=int((C + 2) * B * total_s),
        bytes_accessed=int(B * total_s * (C * pred_bytes + tgt_bytes)
                           + B * nsplit * C * STAT_LANES * 4))

    return pl.pallas_call(
        kernel,
        out_shape=jax.ShapeDtypeStruct((B * nsplit, C, STAT_LANES), jnp.float32),
        grid_spec=pltpu.PrefetchScalarGridSpec(
            num_scalar_prefetch=0,
            grid=grid,
            in_specs=[
                pl.BlockSpec((1, C, tile_s),
                             lambda b, n, s: (b, 0, n * tiles_per_split + s)),
                pl.BlockSpec((1, 1, tile_s),
                             lambda b, n, s: (b, 0, n * tiles_per_split + s)),
            ],
            out_specs=pl.BlockSpec((1, C, STAT_LANES),
                                   lambda b, n, s: (b * nsplit + n, 0, 0)),
        ),
        compiler_params=pltpu.CompilerParams(
            dimension_semantics=("parallel", "parallel", "arbitrary"),
            vmem_limit_bytes=int(vmem_limit)),
        cost_estimate=cost,
    )(pred_bcs, tgt_b1s)


# --------------------------------------------------------------------------- #
# Loss module
# --------------------------------------------------------------------------- #
class VolumeAwareLoss:
    """JAX/Pallas re-implementation of the PyTorch VolumeAwareLoss forward pass."""

    def __init__(self,
                 include_background=False,
                 tversky_alpha=0.3,
                 tversky_beta=0.7,
                 class_weights=(1.0, 2.0, 1.5, 2.5, 1.5),
                 baseline_volumes=(0.0, 2000.0, 8000.0, 1000.0, 3000.0),
                 epsilon=1e-5,
                 reduction='mean',
                 max_tile_lanes=None,
                 stream_bf16=False):
        self.include_background = include_background
        self.alpha = tversky_alpha
        self.beta = tversky_beta
        self.eps = epsilon
        self.reduction = reduction
        self.static_weights = jnp.asarray(class_weights, jnp.float32)
        self.baseline_volumes = jnp.asarray(baseline_volumes, jnp.float32)
        self.n_classes = len(class_weights)
        self.smooth = 1e-5  # MONAI DiceLoss / TverskyLoss smooth_nr = smooth_dr default
        self.max_tile_lanes = max_tile_lanes    # tuning / testing knob
        self.stream_bf16 = stream_bf16          # opt-in narrow streaming (v5e)

    # ---- small (B, C) math shared by kernel path and pure-JAX reference ---- #
    def _dynamic_weights(self, vol):
        # vol: (B, C) per-class target volumes
        mult = jnp.sqrt(self.baseline_volumes[None, :] / jnp.maximum(vol, self.eps))
        mult = jnp.minimum(mult, 3.0)
        eff = self.static_weights[None, :] * mult
        norm = jnp.sum(eff, axis=1, keepdims=True) / self.n_classes
        return eff / jnp.maximum(norm, self.eps)

    def _finalize(self, vol, tp, sum_p, ce_total, pred_cnt, S):
        B, C = vol.shape
        weights = self._dynamic_weights(vol)                          # (B, C)
        fg = slice(0, C) if self.include_background else slice(1, C)

        fp = sum_p - tp                                               # sum p*(1-g)
        fn = vol - tp                                                 # sum (1-p)*g

        # --- DiceCELoss (include_background=False, softmax=True, mean) ---
        dice_pc = 1.0 - (2.0 * tp + self.smooth) / (sum_p + vol + self.smooth)
        dice_mean = jnp.mean(dice_pc[:, fg])
        ce_mean = jnp.sum(ce_total) / (B * S)                         # CrossEntropyLoss(mean)
        dice_ce_loss = 0.5 * dice_mean + 0.5 * ce_mean                # lambda_dice = lambda_ce = 0.5

        # --- TverskyLoss (include_background=False, mean) ---
        tv_pc = 1.0 - (tp + self.smooth) / (
            tp + self.alpha * fp + self.beta * fn + self.smooth)
        tversky_loss = jnp.mean(tv_pc[:, fg])

        # NOTE: the reference module multiplies the *scalar* mean DiceCE/Tversky
        # losses by the per-(b, c) normalized weights and sums over classes; this
        # is reproduced verbatim to keep forward-pass parity with the spec.
        weighted_dice = jnp.sum(dice_ce_loss * weights, axis=1)       # (B,)
        weighted_tversky = jnp.sum(tversky_loss * weights, axis=1)    # (B,)

        # --- surface loss (empty / non-empty mismatch penalty) ---
        tgt_empty = vol <= 0.0
        pred_empty = pred_cnt <= 0.0
        one_empty = jnp.logical_xor(tgt_empty, pred_empty)
        contrib = jnp.where(one_empty, weights * 10.0, 0.0)           # (B, C)
        # TODO(synk): the scipy-EDT Euclidean surface-distance term used when both
        # pred and target are non-empty has no clean Pallas/TPU equivalent; it is
        # omitted (contributes 0) — only the 10*weight mismatch penalty is kept.
        denom = self.n_classes if self.include_background else self.n_classes - 1
        surface_loss = jnp.sum(contrib[:, fg], axis=1) / denom        # (B,)

        total_loss = 0.4 * weighted_dice + 0.4 * weighted_tversky + 0.2 * surface_loss

        if self.reduction == 'mean':
            red = jnp.mean
        elif self.reduction == 'sum':
            red = jnp.sum
        else:
            red = lambda x: x

        return {
            'loss': red(total_loss),
            'dice_ce_loss': red(weighted_dice),
            'tversky_loss': red(weighted_tversky),
            'surface_loss': red(surface_loss),
            'per_sample_loss': total_loss,
            'normalized_weights': weights,
        }

    # ---------------------------- tile planning ---------------------------- #
    def _plan(self, S, C, pred_bytes):
        vmem_cap = _vmem_capacity_bytes()
        c_pad = ((C + 7) // 8) * 8             # sublane padding of f32 intermediates
        # double-buffered input blocks + f32 intermediates, per lane of the tile
        per_lane = 2 * (c_pad * pred_bytes + 8 * 4) + 4 * (6 * c_pad + 48)
        budget = min(vmem_cap // 4, 16 << 20)
        lane_cap = max(128, min((budget // per_lane) // 128 * 128, 32768))
        if self.max_tile_lanes is not None:
            lane_cap = min(lane_cap, max(128, (self.max_tile_lanes // 128) * 128))

        tile_s = _plan_spatial(S, lane_cap)

        # 2-way spatial split keeps both TensorCores busy (even at B == 1) on
        # multi-TC chips; single-TC chips keep an unfragmented grid.
        nsplit = 1
        if _tensorcores_per_chip() >= 2:
            nt = pl.cdiv(S, tile_s)
            if nt % 2 != 0:
                cand = min(lane_cap, pl.cdiv(pl.cdiv(S, nt + 1), 128) * 128)
                if cand >= 128 and pl.cdiv(S, cand) % 2 == 0:
                    tile_s = cand
            nt = pl.cdiv(S, tile_s)
            if nt >= 2 and nt % 2 == 0:
                nsplit = 2

        vmem_limit = int(min(max(vmem_cap // 2, 32 << 20), 64 << 20))
        return tile_s, nsplit, vmem_limit

    # ------------------------------- forward ------------------------------- #
    def __call__(self, pred, target):
        # pred:   (B, C, H, W, D) float logits (f32 or bf16, streamed as-is)
        # target: (B, H, W, D) integer labels, or one-hot (B, C, H, W, D)
        B, C = int(pred.shape[0]), int(pred.shape[1])
        S = 1
        for d in pred.shape[2:]:
            S *= int(d)

        if target.ndim == pred.ndim:            # one-hot target -> indices
            target_idx = jnp.argmax(target, axis=1)
        else:
            target_idx = target

        pred_bcs = pred.reshape(B, C, S)
        if self.stream_bf16 and pred_bcs.dtype == jnp.dtype(jnp.float32):
            pred_bcs = pred_bcs.astype(jnp.bfloat16)   # halves pred HBM traffic
        elif pred_bcs.dtype not in (jnp.dtype(jnp.float32), jnp.dtype(jnp.bfloat16)):
            pred_bcs = pred_bcs.astype(jnp.float32)
        tgt = target_idx.reshape(B, 1, S).astype(jnp.int32)
        # TODO(synk): optional int8 label streaming (n_classes <= 127) would cut the
        # remaining label HBM traffic further on v5e; kept int32 for layout simplicity.

        tile_s, nsplit, vmem_limit = self._plan(
            S, C, jnp.dtype(pred_bcs.dtype).itemsize)

        stats = _compute_stats(pred_bcs, tgt, tile_s=tile_s, nsplit=nsplit,
                               total_s=S, vmem_limit=vmem_limit)
        stats = stats.reshape(B, nsplit, C, STAT_LANES).sum(axis=1)   # (B, C, 128)

        vol = stats[:, :, 0]        # sum g
        tp = stats[:, :, 1]         # sum p*g
        sum_p = stats[:, :, 2]      # sum p
        ce_total = stats[:, 0, 3]   # per-batch total CE (replicated across rows)
        pred_cnt = stats[:, :, 4]   # sum (softmax(p) > 0.5)
        return self._finalize(vol, tp, sum_p, ce_total, pred_cnt, S)

    # ------------------------ pure-JAX reference path ---------------------- #
    def reference(self, pred, target):
        """Pure-JAX (no Pallas) forward pass, used as a correctness oracle."""
        B, C = int(pred.shape[0]), int(pred.shape[1])
        S = 1
        for d in pred.shape[2:]:
            S *= int(d)
        if target.ndim == pred.ndim:
            target_idx = jnp.argmax(target, axis=1)
        else:
            target_idx = target
        logits = pred.reshape(B, C, S).astype(jnp.float32)
        tgt = target_idx.reshape(B, 1, S).astype(jnp.int32)

        m = jnp.max(logits, axis=1, keepdims=True)
        e = jnp.exp(logits - m)
        denom = jnp.sum(e, axis=1, keepdims=True)
        p = e / denom
        g = (jnp.arange(C, dtype=jnp.int32)[None, :, None] == tgt).astype(jnp.float32)

        vol = jnp.sum(g, axis=2)
        tp = jnp.sum(p * g, axis=2)
        sum_p = jnp.sum(p, axis=2)
        cnt = jnp.sum((p > 0.5).astype(jnp.float32), axis=2)
        lse = m + jnp.log(denom)
        tgt_logit = jnp.sum(g * logits, axis=1, keepdims=True)
        ce_total = jnp.sum(lse - tgt_logit, axis=(1, 2))              # (B,)
        return self._finalize(vol, tp, sum_p, ce_total, cnt, S)


# --------------------------------------------------------------------------- #
# Self-test
# --------------------------------------------------------------------------- #
if __name__ == "__main__":
    key = jax.random.PRNGKey(0)
    k_pred, k_tgt, k_pred2, k_tgt2 = jax.random.split(key, 4)

    B, C, H, W, D = 2, 5, 16, 16, 8
    pred = jax.random.normal(k_pred, (B, C, H, W, D), dtype=jnp.float32)
    target = jax.random.randint(k_tgt, (B, H, W, D), 0, C, dtype=jnp.int32)

    loss_fn = VolumeAwareLoss()
    out = jax.jit(loss_fn.__call__)(pred, target)
    out = jax.tree_util.tree_map(jax.block_until_ready, out)

    assert out['loss'].shape == ()
    assert out['per_sample_loss'].shape == (B,)
    assert out['normalized_weights'].shape == (B, C)
    assert bool(jnp.isfinite(out['loss']))

    # Pure-JAX reference agreement (approx EUP reciprocal -> ~1e-3 tolerance).
    ref = jax.jit(loss_fn.reference)(pred, target)
    ref = jax.tree_util.tree_map(jax.block_until_ready, ref)
    for name in ('loss', 'dice_ce_loss', 'tversky_loss', 'surface_loss'):
        assert bool(jnp.allclose(out[name], ref[name], rtol=5e-3, atol=1e-4)), name
    assert bool(jnp.allclose(out['per_sample_loss'], ref['per_sample_loss'],
                             rtol=5e-3, atol=1e-4))
    assert bool(jnp.allclose(out['normalized_weights'], ref['normalized_weights'],
                             rtol=1e-5, atol=1e-5))

    # Multi-tile accumulation (small tiles, possibly split across TensorCores)
    # agrees with the single-big-tile plan.
    out_small = jax.jit(VolumeAwareLoss(max_tile_lanes=256).__call__)(pred, target)
    out_small = jax.tree_util.tree_map(jax.block_until_ready, out_small)
    assert bool(jnp.allclose(out['loss'], out_small['loss'], rtol=5e-3, atol=1e-5))
    assert bool(jnp.allclose(out['per_sample_loss'], out_small['per_sample_loss'],
                             rtol=5e-3, atol=1e-5))

    # Ragged spatial extent (S = 315, not a multiple of the tile): only the tail
    # tile runs the masked branch; no wrapper-side padding copy is made.
    Hr, Wr, Dr = 7, 9, 5
    pred_r = jax.random.normal(k_pred2, (1, C, Hr, Wr, Dr), dtype=jnp.float32)
    target_r = jax.random.randint(k_tgt2, (1, Hr, Wr, Dr), 0, C, dtype=jnp.int32)
    loss_r = VolumeAwareLoss(max_tile_lanes=128)
    out_r = jax.jit(loss_r.__call__)(pred_r, target_r)
    ref_r = jax.jit(loss_r.reference)(pred_r, target_r)
    out_r = jax.tree_util.tree_map(jax.block_until_ready, out_r)
    assert bool(jnp.allclose(out_r['loss'], ref_r['loss'], rtol=5e-3, atol=1e-4))
    assert bool(jnp.allclose(out_r['per_sample_loss'], ref_r['per_sample_loss'],
                             rtol=5e-3, atol=1e-4))

    # Opt-in bf16 streaming of pred (halves HBM traffic; useful on v5e).
    out_bf16 = jax.jit(VolumeAwareLoss(stream_bf16=True).__call__)(pred, target)
    out_bf16 = jax.tree_util.tree_map(jax.block_until_ready, out_bf16)
    assert bool(jnp.isfinite(out_bf16['loss']))
    assert bool(jnp.allclose(out['loss'], out_bf16['loss'], rtol=5e-2, atol=1e-2))

    print("KERNEL_OK")
</pallas_src>

<mosaic_0001>
module attributes {stable_mosaic.version = 11 : i64} {
  func.func @_stats_kernel(%arg0: i32, %arg1: i32, %arg2: i32, %arg3: memref<1x5x2048xf32, #tpu.memory_space<vmem>>, %arg4: memref<1x1x2048xi32, #tpu.memory_space<vmem>>, %arg5: memref<1x5x128xf32, #tpu.memory_space<vmem>>) attributes {dimension_semantics = [#tpu.dimension_semantics<parallel>, #tpu.dimension_semantics<parallel>, #tpu.dimension_semantics<arbitrary>], iteration_bounds = array<i64: 2, 1, 1>, scalar_prefetch = 0 : i64, scratch_operands = 0 : i64, tpu.core_type = #tpu.core_type<tc>, window_params = [{transform_indices = @transform_0, window_bounds = array<i64: 1, 5, 2048>}, {transform_indices = @transform_1, window_bounds = array<i64: 1, 1, 2048>}, {transform_indices = @transform_2, window_bounds = array<i64: 1, 5, 128>}]} {
    %c0_i32 = arith.constant 0 : i32
    %0 = arith.cmpi eq, %arg2, %c0_i32 : i32
    %1 = arith.extui %0 : i1 to i32
    %c0_i32_0 = arith.constant 0 : i32
    %2 = arith.cmpi ne, %1, %c0_i32_0 : i32
    scf.if %2 {
      %cst_28 = arith.constant 0.000000e+00 : f32
      %91 = vector.broadcast %cst_28 : f32 to vector<1x5x128xf32>
      %c0_29 = arith.constant 0 : index
      %c0_30 = arith.constant 0 : index
      %c0_31 = arith.constant 0 : index
      %92 = vector.load %arg5[%c0_29, %c0_30, %c0_31] : memref<1x5x128xf32, #tpu.memory_space<vmem>>, vector<1x5x128xf32>
      tpu.vector_store %arg5[%c0_29, %c0_30, %c0_31], %91 {strides = array<i32>} : memref<1x5x128xf32, #tpu.memory_space<vmem>>, vector<1x5x128xf32>,
    } else {
    }
    %c0 = arith.constant 0 : index
    %c0_1 = arith.constant 0 : index
    %c0_2 = arith.constant 0 : index
    %3 = vector.load %arg3[%c0, %c0_1, %c0_2] : memref<1x5x2048xf32, #tpu.memory_space<vmem>>, vector<1x5x2048xf32>
    %c0_3 = arith.constant 0 : index
    %c0_4 = arith.constant 0 : index
    %c0_5 = arith.constant 0 : index
    %4 = vector.load %arg4[%c0_3, %c0_4, %c0_5] : memref<1x1x2048xi32, #tpu.memory_space<vmem>>, vector<1x1x2048xi32>
    %cst = arith.constant dense<0xFF800000> : vector<1x2048xf32>
    %5 = vector.multi_reduction <maximumf>, %3, %cst [1] : vector<1x5x2048xf32> to vector<1x2048xf32>
    %6 = vector.shape_cast %5 : vector<1x2048xf32> to vector<1x1x2048xf32>
    %7 = vector.broadcast %6 : vector<1x1x2048xf32> to vector<1x5x2048xf32>
    %8 = arith.subf %3, %7 : vector<1x5x2048xf32>
    %9 = math.exp %8 : vector<1x5x2048xf32>
    %cst_6 = arith.constant dense<0.000000e+00> : vector<1x2048xf32>
    %10 = vector.multi_reduction <add>, %9, %cst_6 [1] : vector<1x5x2048xf32> to vector<1x2048xf32>
    %11 = vector.shape_cast %10 : vector<1x2048xf32> to vector<1x1x2048xf32>
    %12 = tpu.reciprocal %11 {approx = true} : vector<1x1x2048xf32> -> vector<1x1x2048xf32>
    %13 = vector.broadcast %12 : vector<1x1x2048xf32> to vector<1x5x2048xf32>
    %14 = arith.mulf %9, %13 : vector<1x5x2048xf32>
    %15 = tpu.iota {dimensions = array<i32: 1>} : vector<1x5x1xi32>
    %16 = vector.broadcast %15 : vector<1x5x1xi32> to vector<1x5x2048xi32>
    %17 = vector.broadcast %4 : vector<1x1x2048xi32> to vector<1x5x2048xi32>
    %18 = arith.cmpi eq, %16, %17 : vector<1x5x2048xi32>
    %19 = arith.extui %18 : vector<1x5x2048xi1> to vector<1x5x2048xi32>
    %20 = arith.sitofp %19 : vector<1x5x2048xi32> to vector<1x5x2048xf32>
    %cst_7 = arith.constant dense<0.000000e+00> : vector<1x5xf32>
    %21 = vector.multi_reduction <add>, %20, %cst_7 [2] : vector<1x5x2048xf32> to vector<1x5xf32>
    %22 = vector.shape_cast %21 : vector<1x5xf32> to vector<1x5x1xf32>
    %cst_8 = arith.constant 0.000000e+00 : f32
    %23 = vector.broadcast %cst_8 : f32 to vector<1x5x2048xf32>
    %24 = arith.select %18, %14, %23 : vector<1x5x2048xi1>, vector<1x5x2048xf32>
    %cst_9 = arith.constant dense<0.000000e+00> : vector<1x5xf32>
    %25 = vector.multi_reduction <add>, %24, %cst_9 [2] : vector<1x5x2048xf32> to vector<1x5xf32>
    %26 = vector.shape_cast %25 : vector<1x5xf32> to vector<1x5x1xf32>
    %cst_10 = arith.constant dense<0.000000e+00> : vector<1x5xf32>
    %27 = vector.multi_reduction <add>, %14, %cst_10 [2] : vector<1x5x2048xf32> to vector<1x5xf32>
    %28 = vector.shape_cast %27 : vector<1x5xf32> to vector<1x5x1xf32>
    %cst_11 = arith.constant 5.000000e-01 : f32
    %29 = vector.broadcast %cst_11 : f32 to vector<1x5x2048xf32>
    %30 = arith.cmpf ogt, %14, %29 : vector<1x5x2048xf32>
    %31 = arith.extui %30 : vector<1x5x2048xi1> to vector<1x5x2048xi32>
    %32 = arith.sitofp %31 : vector<1x5x2048xi32> to vector<1x5x2048xf32>
    %cst_12 = arith.constant dense<0.000000e+00> : vector<1x5xf32>
    %33 = vector.multi_reduction <add>, %32, %cst_12 [2] : vector<1x5x2048xf32> to vector<1x5xf32>
    %34 = vector.shape_cast %33 : vector<1x5xf32> to vector<1x5x1xf32>
    %35 = math.log %11 : vector<1x1x2048xf32>
    %36 = arith.addf %6, %35 : vector<1x1x2048xf32>
    %cst_13 = arith.constant 0.000000e+00 : f32
    %37 = vector.broadcast %cst_13 : f32 to vector<1x5x2048xf32>
    %38 = arith.select %18, %3, %37 : vector<1x5x2048xi1>, vector<1x5x2048xf32>
    %cst_14 = arith.constant dense<0.000000e+00> : vector<1x2048xf32>
    %39 = vector.multi_reduction <add>, %38, %cst_14 [1] : vector<1x5x2048xf32> to vector<1x2048xf32>
    %40 = vector.shape_cast %39 : vector<1x2048xf32> to vector<1x1x2048xf32>
    %41 = arith.subf %36, %40 : vector<1x1x2048xf32>
    %cst_15 = arith.constant dense<0.000000e+00> : vector<1x1xf32>
    %42 = vector.multi_reduction <add>, %41, %cst_15 [2] : vector<1x1x2048xf32> to vector<1x1xf32>
    %43 = vector.shape_cast %42 : vector<1x1xf32> to vector<1x1x1xf32>
    %44 = tpu.iota {dimensions = array<i32: 2>} : vector<1x1x128xi32>
    %c0_i32_16 = arith.constant 0 : i32
    %45 = vector.broadcast %c0_i32_16 : i32 to vector<1x1x128xi32>
    %46 = arith.cmpi eq, %44, %45 : vector<1x1x128xi32>
    %cst_17 = arith.constant 0.000000e+00 : f32
    %47 = vector.shape_cast %46 : vector<1x1x128xi1> to vector<1x1x128xi1>
    %48 = vector.broadcast %47 : vector<1x1x128xi1> to vector<1x5x128xi1>
    %49 = vector.shape_cast %22 : vector<1x5x1xf32> to vector<1x5x1xf32>
    %50 = vector.broadcast %49 : vector<1x5x1xf32> to vector<1x5x128xf32>
    %51 = vector.broadcast %cst_17 : f32 to vector<1x5x128xf32>
    %52 = arith.select %48, %50, %51 : vector<1x5x128xi1>, vector<1x5x128xf32>
    %c1_i32 = arith.constant 1 : i32
    %53 = vector.broadcast %c1_i32 : i32 to vector<1x1x128xi32>
    %54 = arith.cmpi eq, %44, %53 : vector<1x1x128xi32>
    %cst_18 = arith.constant 0.000000e+00 : f32
    %55 = vector.shape_cast %54 : vector<1x1x128xi1> to vector<1x1x128xi1>
    %56 = vector.broadcast %55 : vector<1x1x128xi1> to vector<1x5x128xi1>
    %57 = vector.shape_cast %26 : vector<1x5x1xf32> to vector<1x5x1xf32>
    %58 = vector.broadcast %57 : vector<1x5x1xf32> to vector<1x5x128xf32>
    %59 = vector.broadcast %cst_18 : f32 to vector<1x5x128xf32>
    %60 = arith.select %56, %58, %59 : vector<1x5x128xi1>, vector<1x5x128xf32>
    %61 = arith.addf %52, %60 : vector<1x5x128xf32>
    %c2_i32 = arith.constant 2 : i32
    %62 = vector.broadcast %c2_i32 : i32 to vector<1x1x128xi32>
    %63 = arith.cmpi eq, %44, %62 : vector<1x1x128xi32>
    %cst_19 = arith.constant 0.000000e+00 : f32
    %64 = vector.shape_cast %63 : vector<1x1x128xi1> to vector<1x1x128xi1>
    %65 = vector.broadcast %64 : vector<1x1x128xi1> to vector<1x5x128xi1>
    %66 = vector.shape_cast %28 : vector<1x5x1xf32> to vector<1x5x1xf32>
    %67 = vector.broadcast %66 : vector<1x5x1xf32> to vector<1x5x128xf32>
    %68 = vector.broadcast %cst_19 : f32 to vector<1x5x128xf32>
    %69 = arith.select %65, %67, %68 : vector<1x5x128xi1>, vector<1x5x128xf32>
    %70 = arith.addf %61, %69 : vector<1x5x128xf32>
    %c3_i32 = arith.constant 3 : i32
    %71 = vector.broadcast %c3_i32 : i32 to vector<1x1x128xi32>
    %72 = arith.cmpi eq, %44, %71 : vector<1x1x128xi32>
    %cst_20 = arith.constant 0.000000e+00 : f32
    %73 = vector.shape_cast %43 : vector<1x1x1xf32> to vector<1x1x1xf32>
    %74 = vector.broadcast %73 : vector<1x1x1xf32> to vector<1x1x128xf32>
    %75 = vector.broadcast %cst_20 : f32 to vector<1x1x128xf32>
    %76 = arith.select %72, %74, %75 : vector<1x1x128xi1>, vector<1x1x128xf32>
    %77 = vector.broadcast %76 : vector<1x1x128xf32> to vector<1x5x128xf32>
    %78 = arith.addf %70, %77 : vector<1x5x128xf32>
    %c4_i32 = arith.constant 4 : i32
    %79 = vector.broadcast %c4_i32 : i32 to vector<1x1x128xi32>
    %80 = arith.cmpi eq, %44, %79 : vector<1x1x128xi32>
    %cst_21 = arith.constant 0.000000e+00 : f32
    %81 = vector.shape_cast %80 : vector<1x1x128xi1> to vector<1x1x128xi1>
    %82 = vector.broadcast %81 : vector<1x1x128xi1> to vector<1x5x128xi1>
    %83 = vector.shape_cast %34 : vector<1x5x1xf32> to vector<1x5x1xf32>
    %84 = vector.broadcast %83 : vector<1x5x1xf32> to vector<1x5x128xf32>
    %85 = vector.broadcast %cst_21 : f32 to vector<1x5x128xf32>
    %86 = arith.select %82, %84, %85 : vector<1x5x128xi1>, vector<1x5x128xf32>
    %87 = arith.addf %78, %86 : vector<1x5x128xf32>
    %c0_22 = arith.constant 0 : index
    %c0_23 = arith.constant 0 : index
    %c0_24 = arith.constant 0 : index
    %88 = vector.load %arg5[%c0_22, %c0_23, %c0_24] : memref<1x5x128xf32, #tpu.memory_space<vmem>>, vector<1x5x128xf32>
    %89 = arith.addf %88, %87 : vector<1x5x128xf32>
    %c0_25 = arith.constant 0 : index
    %c0_26 = arith.constant 0 : index
    %c0_27 = arith.constant 0 : index
    %90 = vector.load %arg5[%c0_25, %c0_26, %c0_27] : memref<1x5x128xf32, #tpu.memory_space<vmem>>, vector<1x5x128xf32>
    tpu.vector_store %arg5[%c0_25, %c0_26, %c0_27], %89 {strides = array<i32>} : memref<1x5x128xf32, #tpu.memory_space<vmem>>, vector<1x5x128xf32>,
    return
  }
  func.func @transform_0(%arg0: i32, %arg1: i32, %arg2: i32) -> (i32, i32, i32) {
    %c1_i32 = arith.constant 1 : i32
    %0 = arith.muli %arg1, %c1_i32 : i32
    %1 = arith.addi %0, %arg2 : i32
    %c0_i32 = arith.constant 0 : i32
    %c0_i32_0 = arith.constant 0 : i32
    return %arg0, %c0_i32, %1 : i32, i32, i32
  }
  func.func @transform_1(%arg0: i32, %arg1: i32, %arg2: i32) -> (i32, i32, i32) {
    %c1_i32 = arith.constant 1 : i32
    %0 = arith.muli %arg1, %c1_i32 : i32
    %1 = arith.addi %0, %arg2 : i32
    %c0_i32 = arith.constant 0 : i32
    %c0_i32_0 = arith.constant 0 : i32
    return %arg0, %c0_i32, %1 : i32, i32, i32
  }
  func.func @transform_2(%arg0: i32, %arg1: i32, %arg2: i32) -> (i32, i32, i32) {
    %c1_i32 = arith.constant 1 : i32
    %0 = arith.muli %arg0, %c1_i32 : i32
    %1 = arith.addi %0, %arg1 : i32
    %c0_i32 = arith.constant 0 : i32
    %c0_i32_0 = arith.constant 0 : i32
    %c0_i32_1 = arith.constant 0 : i32
    return %1, %c0_i32, %c0_i32_0 : i32, i32, i32
  }
}

</mosaic_0001>

<llo_original>
// kernel: a_call__.1
$region0: #{a_call__.1}
  #allocation0 [shape = 'u32[]', space=smem, size = 0x4, offset = 0x4, fixed_abs, tag = 'smem constant byte address 0x4 - core index']
  #allocation1 [shape = 'u32[144,128]{1,0:T(1,128)}', space=vmem, size = 0x12000, scoped, tag = 'internal scratch']
  %s0 = inlined_call_operand.vmem [shape: f32[2,5,2048], index: 0, kind: input, shape index: {}]
  %s1 = inlined_call_operand.vmem [shape: s32[2,1,2048], index: 1, kind: input, shape index: {}]
  %s2 = inlined_call_operand.vmem [shape: f32[2,5,128], index: 2, kind: output, shape index: {}]
  %s3 = sld [smem:[#allocation0]]
  $region45: #{a_call__.1} parent=0
    _
  %s5 = ssub.s32 1, %s3
  %s6 = scalar_select 0, %s5, %s3
  loop: start=0, step=1, limit=4
  $region2: #{a_call__.1} parent=0 // loop_pre_header
    _
  $region3: #{a_call__.1} parent=0 // loop_header
    %s8 = sphi 0, %s12
    %p9 = scmp.ge.s32.totalorder %s8, 4
    %s15 = sphi 0, %s34
    %s16 = sphi 0, %s30
    %s17 = sphi 0, %s26
    %s18 = sphi 0, %s15
    %s19 = sphi 0, %s16
    %s20 = sphi 0, %s17
    %s21 = sphi 0, %s18
    %s22 = sphi 0, %s19
    %s23 = sphi 0, %s20
    %s41 = sphi 0, %s43
    %s44 = sphi 0, %s41
    %s45 = sphi 0, %s44
    %s61 = sphi 0, %s45
    %s71 = sphi 0, %s73
    %s74 = sphi 0, %s71
    %s75 = sphi 0, %s74
    %s91 = sphi 0, %s75
    %s99 = sphi 0, %s101
    %s102 = sphi 0, %s99
    %s103 = sphi 0, %s102
    %s119 = sphi 0, %s103
  $region4: #{a_call__.1} parent=0 // loop_header_branch
    %11 = sbr.rel (%p9) target = $region8
  $region5: #{a_call__.1} parent=0 // loop_body
    %s13 = ssub.s32 %s8, 1
    %s14 = ssub.s32 %s8, 2
    %s24 = sadd.s32 1, %s17
    %p25 = scmp.ge.s32.totalorder %s24, 1
    %s26 = scalar_select %p25, 0, %s24
    %s27 = sadd.s32 1, %s16
    %s28 = scalar_select %p25, %s27, %s16
    %p29 = scmp.ge.s32.totalorder %s28, 1
    %s30 = scalar_select %p29, 0, %s28
    %s31 = sadd.s32 1, %s15
    %s32 = scalar_select %p29, %s31, %s15
    %p33 = scmp.ge.s32.totalorder %s32, 2
    %s34 = scalar_select %p33, 0, %s32
    %s35 = sadd.s32 %s16, %s17
    %s36 = sadd.s32 %s30, %s26
    %s37 = ssub.s32 %s15, %s34
    %s38 = ssub.s32 %s35, %s36
    %s39 = sor.u32 %s37, %s38
    %p40 = scmp.eq.s32.totalorder %s39, 0
    %s42 = sadd.s32 %s41, 1
    %s43 = scalar_select %p40, %s41, %s42
    %p46 = pneg %p40
    %p47 = scmp.eq.s32.totalorder %s8, 1
    %p48 = por %p46, %p47
    %p49 = scmp.ne.s32.totalorder %s41, %s44
    %p50 = scmp.eq.s32.totalorder %s8, 0
    %p51 = por %p49, %p50
    %p52 = scmp.ne.s32.totalorder %s41, %s44
    %p53 = scmp.eq.s32.totalorder %s13, 1
    %p54 = por %p52, %p53
    %p55 = scmp.ne.s32.totalorder %s44, %s45
    %p56 = scmp.eq.s32.totalorder %s13, 0
    %p57 = por %p55, %p56
    %p58 = scmp.ne.s32.totalorder %s44, %s45
    %p59 = scmp.eq.s32.totalorder %s14, 1
    %p60 = por %p58, %p59
    %p62 = scmp.ne.s32.totalorder %s45, %s61
    %p63 = scmp.eq.s32.totalorder %s14, 0
    %p64 = por %p62, %p63
    %s65 = sadd.s32 %s16, %s17
    %s66 = sadd.s32 %s30, %s26
    %s67 = ssub.s32 %s15, %s34
    %s68 = ssub.s32 %s65, %s66
    %s69 = sor.u32 %s67, %s68
    %p70 = scmp.eq.s32.totalorder %s69, 0
    %s72 = sadd.s32 %s71, 1
    %s73 = scalar_select %p70, %s71, %s72
    %p76 = pneg %p70
    %p77 = scmp.eq.s32.totalorder %s8, 1
    %p78 = por %p76, %p77
    %p79 = scmp.ne.s32.totalorder %s71, %s74
    %p80 = scmp.eq.s32.totalorder %s8, 0
    %p81 = por %p79, %p80
    %p82 = scmp.ne.s32.totalorder %s71, %s74
    %p83 = scmp.eq.s32.totalorder %s13, 1
    %p84 = por %p82, %p83
    %p85 = scmp.ne.s32.totalorder %s74, %s75
    %p86 = scmp.eq.s32.totalorder %s13, 0
    %p87 = por %p85, %p86
    %p88 = scmp.ne.s32.totalorder %s74, %s75
    %p89 = scmp.eq.s32.totalorder %s14, 1
    %p90 = por %p88, %p89
    %p92 = scmp.ne.s32.totalorder %s75, %s91
    %p93 = scmp.eq.s32.totalorder %s14, 0
    %p94 = por %p92, %p93
    %s95 = sadd.s32 %s15, %s16
    %s96 = sadd.s32 %s34, %s30
    %s97 = ssub.s32 %s95, %s96
    %p98 = scmp.eq.s32.totalorder %s97, 0
    %s100 = sadd.s32 %s99, 1
    %s101 = scalar_select %p98, %s99, %s100
    %p104 = pneg %p98
    %p105 = scmp.eq.s32.totalorder %s8, 1
    %p106 = por %p104, %p105
    %p107 = scmp.ne.s32.totalorder %s99, %s102
    %p108 = scmp.eq.s32.totalorder %s8, 0
    %p109 = por %p107, %p108
    %p110 = scmp.ne.s32.totalorder %s99, %s102
    %p111 = scmp.eq.s32.totalorder %s13, 1
    %p112 = por %p110, %p111
    %p113 = scmp.ne.s32.totalorder %s102, %s103
    %p114 = scmp.eq.s32.totalorder %s13, 0
    %p115 = por %p113, %p114
    %p116 = scmp.ne.s32.totalorder %s102, %s103
    %p117 = scmp.eq.s32.totalorder %s14, 1
    %p118 = por %p116, %p117
    %p120 = scmp.ne.s32.totalorder %s103, %s119
    %p121 = scmp.eq.s32.totalorder %s14, 0
    %p122 = por %p120, %p121
    %p123 = scmp.le.s32.totalorder 1, %s8
    %p124 = scmp.lt.s32.totalorder %s8, 3
    %p125 = pnand %p123, %p124
    %p126 = pneg %p125
    // Predicated region
    $region9: #{a_call__.1} parent=5 // pred_check
      _
    $region10: #{a_call__.1} parent=5 // pred_check_branch
      %128 = sbr.rel (%p125) target = $region12
    $region11: #{a_call__.1} parent=5 // pred_region
      %s129 = ssub.s32 %s8, 1
    $region12: #{a_call__.1} parent=5 // pred_fallthru
      _
    %p130 = scmp.lt.s32.totalorder %s8, 2
    // Predicated region
    $region13: #{a_call__.1} parent=5 // pred_check
      %p131 = pneg %p130
    $region14: #{a_call__.1} parent=5 // pred_check_branch
      %133 = sbr.rel (%p131) target = $region16
    $region15: #{a_call__.1} parent=5 // pred_region
      // Predicated region
      $region17: #{a_call__.1} parent=15 // pred_check
        %p134 = pneg %p51
      $region18: #{a_call__.1} parent=15 // pred_check_branch
        %136 = sbr.rel (%p134) target = $region20
      $region19: #{a_call__.1} parent=15 // pred_region
        %s137 = sadd.s32 %s16, %s17
        %s138 = smul.u32 16, %s137
        %p139 = scmp.lt.s32.totalorder %s15, 1
        %s140 = scalar_select %p139, %s15, 1
        %p141 = scmp.lt.s32.totalorder %s138, 15
        %s142 = scalar_select %p141, %s138, 15
        %s143 = smul.addr %s140, 16
        %s144 = sadd.s32 %s142, %s143
        %s145 = smul.addr %s144, 8
        %s146 = scalar_lea.vmem %s0, %s145
        %s147 = sadd.s32 %s16, %s17
        %s148 = smul.u32 16, %s147
      $region20: #{a_call__.1} parent=15 // pred_fallthru
        _
      // Predicated region
      $region21: #{a_call__.1} parent=15 // pred_check
        %p149 = pneg %p81
      $region22: #{a_call__.1} parent=15 // pred_check_branch
        %151 = sbr.rel (%p149) target = $region24
      $region23: #{a_call__.1} parent=15 // pred_region
        %s152 = sadd.s32 %s16, %s17
        %s153 = smul.u32 16, %s152
        %p154 = scmp.lt.s32.totalorder %s15, 1
        %s155 = scalar_select %p154, %s15, 1
        %p156 = scmp.lt.s32.totalorder %s153, 15
        %s157 = scalar_select %p156, %s153, 15
        %s158 = smul.addr %s155, 16
        %s159 = sadd.s32 %s157, %s158
        %s160 = scalar_lea.vmem %s1, %s159
        %s161 = sadd.s32 %s16, %s17
        %s162 = smul.u32 16, %s161
      $region24: #{a_call__.1} parent=15 // pred_fallthru
        _
    $region16: #{a_call__.1} parent=5 // pred_fallthru
      _
    %p163 = scmp.le.s32.totalorder 1, %s8
    %p164 = scmp.lt.s32.totalorder %s8, 3
    %p165 = pnand %p163, %p164
    %p166 = pneg %p165
    // Predicated region
    $region25: #{a_call__.1} parent=5 // pred_check
      _
    $region26: #{a_call__.1} parent=5 // pred_check_branch
      %168 = sbr.rel (%p165) target = $region28
    $region27: #{a_call__.1} parent=5 // pred_region
      %s169 = ssub.s32 %s8, 1
      %s170 = sadd.s32 %s19, %s20
      %s171 = smul.u32 16, %s170
      %p172 = scmp.lt.s32.totalorder %s18, 1
      %s173 = scalar_select %p172, %s18, 1
      %p174 = scmp.lt.s32.totalorder %s171, 15
      %s175 = scalar_select %p174, %s171, 15
      %s176 = smul.addr %s173, 16
      %s177 = sadd.s32 %s175, %s176
      %s178 = smul.addr %s177, 8
      %s179 = scalar_lea.vmem %s0, %s178
      %p180 = pneg %p57
      %p181 = pneg %p54
      %s182 = sadd.s32 %s19, %s20
      %s183 = smul.u32 16, %s182
      %p184 = scmp.lt.s32.totalorder %s18, 1
      %s185 = scalar_select %p184, %s18, 1
      %p186 = scmp.lt.s32.totalorder %s183, 15
      %s187 = scalar_select %p186, %s183, 15
      %s188 = smul.addr %s185, 16
      %s189 = sadd.s32 %s187, %s188
      %s190 = scalar_lea.vmem %s1, %s189
      %p191 = pneg %p87
      %p192 = pneg %p84
      %p193 = pneg %p115
      %p194 = pneg %p112
      %s195 = sadd.s32 %s18, %s19
      %p196 = scmp.lt.s32.totalorder %s195, 1
      %s197 = scalar_select %p196, %s195, 1
      %s198 = smul.addr %s197, 8
      %s199 = scalar_lea.vmem %s2, %s198
      %s200 = sadd.s32 %s19, %s20
      %s201 = smul.u32 16, %s200
      %p202 = scmp.lt.s32.totalorder %s18, 1
      %s203 = scalar_select %p202, %s18, 1
      %p204 = scmp.lt.s32.totalorder %s201, 15
      %s205 = scalar_select %p204, %s201, 15
      %s206 = smul.addr %s203, 16
      %s207 = sadd.s32 %s205, %s206
      %s208 = smul.addr %s207, 8
      %s209 = scalar_lea.vmem %s0, %s208
      %s210 = sadd.s32 %s19, %s20
      %s211 = smul.u32 16, %s210
      %s212 = sadd.s32 %s19, %s20
      %s213 = smul.u32 16, %s212
      %p214 = scmp.lt.s32.totalorder %s18, 1
      %s215 = scalar_select %p214, %s18, 1
      %p216 = scmp.lt.s32.totalorder %s213, 15
      %s217 = scalar_select %p216, %s213, 15
      %s218 = smul.addr %s215, 16
      %s219 = sadd.s32 %s217, %s218
      %s220 = scalar_lea.vmem %s1, %s219
      %s221 = sadd.s32 %s19, %s20
      %s222 = smul.u32 16, %s221
      %s223 = sadd.s32 %s18, %s19
      %p224 = scmp.lt.s32.totalorder %s223, 1
      %s225 = scalar_select %p224, %s223, 1
      %s226 = smul.addr %s225, 8
      %s227 = scalar_lea.vmem %s2, %s226
      %s228 = sadd.s32 %s18, %s19
      %p229 = scmp.eq.s32.totalorder %s20, 0
      // Predicated region
      $region29: #{a_call__.1} parent=27 // pred_check
        %p230 = pneg %p229
      $region30: #{a_call__.1} parent=27 // pred_check_branch
        %232 = sbr.rel (%p230) target = $region32
      $region31: #{a_call__.1} parent=27 // pred_region
        %233 = vst [vmem:[%s227] sm:$0x1f] 0.0
      $region32: #{a_call__.1} parent=27 // pred_fallthru
        _
      %v234 = vld [vmem:[%s209] sm:$0x1f]
      %v235 = vld [vmem:[%s209 + $0x8] sm:$0x1f]
      %v236 = vld [vmem:[%s209 + $0x10] sm:$0x1f]
      %v237 = vld [vmem:[%s209 + $0x18] sm:$0x1f]
      %v238 = vld [vmem:[%s209 + $0x20] sm:$0x1f]
      %v239 = vld [vmem:[%s209 + $0x28] sm:$0x1f]
      %v240 = vld [vmem:[%s209 + $0x30] sm:$0x1f]
      %v241 = vld [vmem:[%s209 + $0x38] sm:$0x1f]
      %v242 = vld [vmem:[%s209 + $0x40] sm:$0x1f]
      %v243 = vld [vmem:[%s209 + $0x48] sm:$0x1f]
      %v244 = vld [vmem:[%s209 + $0x50] sm:$0x1f]
      %v245 = vld [vmem:[%s209 + $0x58] sm:$0x1f]
      %v246 = vld [vmem:[%s209 + $0x60] sm:$0x1f]
      %v247 = vld [vmem:[%s209 + $0x68] sm:$0x1f]
      %v248 = vld [vmem:[%s209 + $0x70] sm:$0x1f]
      %v249 = vld [vmem:[%s209 + $0x78] sm:$0x1f]
      %v250 = vld [vmem:[%s220] sm:$0xff]
      %v251 = vld [vmem:[%s220 + $0x8] sm:$0xff]
      %vm252 = vcmask 1044480
      %v253 = vsel %vm252, %v234, -inf
      %v254 = vrot.slane %v253, 4
      %v255 = vmax.f32 %v253, %v254
      %v256 = vrot.slane %v255, 2
      %v257 = vmax.f32 %v255, %v256
      %v258 = vrot.slane %v257, 1
      %v259 = vmax.f32 %v257, %v258
      %v260 = vsel %vm252, %v235, -inf
      %v261 = vrot.slane %v260, 4
      %v262 = vmax.f32 %v260, %v261
      %v263 = vrot.slane %v262, 2
      %v264 = vmax.f32 %v262, %v263
      %v265 = vrot.slane %v264, 1
      %v266 = vmax.f32 %v264, %v265
      %v267 = vsel %vm252, %v236, -inf
      %v268 = vrot.slane %v267, 4
      %v269 = vmax.f32 %v267, %v268
      %v270 = vrot.slane %v269, 2
      %v271 = vmax.f32 %v269, %v270
      %v272 = vrot.slane %v271, 1
      %v273 = vmax.f32 %v271, %v272
      %v274 = vsel %vm252, %v237, -inf
      %v275 = vrot.slane %v274, 4
      %v276 = vmax.f32 %v274, %v275
      %v277 = vrot.slane %v276, 2
      %v278 = vmax.f32 %v276, %v277
      %v279 = vrot.slane %v278, 1
      %v280 = vmax.f32 %v278, %v279
      %v281 = vsel %vm252, %v238, -inf
      %v282 = vrot.slane %v281, 4
      %v283 = vmax.f32 %v281, %v282
      %v284 = vrot.slane %v283, 2
      %v285 = vmax.f32 %v283, %v284
      %v286 = vrot.slane %v285, 1
      %v287 = vmax.f32 %v285, %v286
      %v288 = vsel %vm252, %v239, -inf
      %v289 = vrot.slane %v288, 4
      %v290 = vmax.f32 %v288, %v289
      %v291 = vrot.slane %v290, 2
      %v292 = vmax.f32 %v290, %v291
      %v293 = vrot.slane %v292, 1
      %v294 = vmax.f32 %v292, %v293
      %v295 = vsel %vm252, %v240, -inf
      %v296 = vrot.slane %v295, 4
      %v297 = vmax.f32 %v295, %v296
      %v298 = vrot.slane %v297, 2
      %v299 = vmax.f32 %v297, %v298
      %v300 = vrot.slane %v299, 1
      %v301 = vmax.f32 %v299, %v300
      %v302 = vsel %vm252, %v241, -inf
      %v303 = vrot.slane %v302, 4
      %v304 = vmax.f32 %v302, %v303
      %v305 = vrot.slane %v304, 2
      %v306 = vmax.f32 %v304, %v305
      %v307 = vrot.slane %v306, 1
      %v308 = vmax.f32 %v306, %v307
      %v309 = vsel %vm252, %v242, -inf
      %v310 = vrot.slane %v309, 4
      %v311 = vmax.f32 %v309, %v310
      %v312 = vrot.slane %v311, 2
      %v313 = vmax.f32 %v311, %v312
      %v314 = vrot.slane %v313, 1
      %v315 = vmax.f32 %v313, %v314
      %v316 = vsel %vm252, %v243, -inf
      %v317 = vrot.slane %v316, 4
      %v318 = vmax.f32 %v316, %v317
      %v319 = vrot.slane %v318, 2
      %v320 = vmax.f32 %v318, %v319
      %v321 = vrot.slane %v320, 1
      %v322 = vmax.f32 %v320, %v321
      %v323 = vsel %vm252, %v244, -inf
      %v324 = vrot.slane %v323, 4
      %v325 = vmax.f32 %v323, %v324
      %v326 = vrot.slane %v325, 2
      %v327 = vmax.f32 %v325, %v326
      %v328 = vrot.slane %v327, 1
      %v329 = vmax.f32 %v327, %v328
      %v330 = vsel %vm252, %v245, -inf
      %v331 = vrot.slane %v330, 4
      %v332 = vmax.f32 %v330, %v331
      %v333 = vrot.slane %v332, 2
      %v334 = vmax.f32 %v332, %v333
      %v335 = vrot.slane %v334, 1
      %v336 = vmax.f32 %v334, %v335
      %v337 = vsel %vm252, %v246, -inf
      %v338 = vrot.slane %v337, 4
      %v339 = vmax.f32 %v337, %v338
      %v340 = vrot.slane %v339, 2
      %v341 = vmax.f32 %v339, %v340
      %v342 = vrot.slane %v341, 1
      %v343 = vmax.f32 %v341, %v342
      %v344 = vsel %vm252, %v247, -inf
      %v345 = vrot.slane %v344, 4
      %v346 = vmax.f32 %v344, %v345
      %v347 = vrot.slane %v346, 2
      %v348 = vmax.f32 %v346, %v347
      %v349 = vrot.slane %v348, 1
      %v350 = vmax.f32 %v348, %v349
      %v351 = vsel %vm252, %v248, -inf
      %v352 = vrot.slane %v351, 4
      %v353 = vmax.f32 %v351, %v352
      %v354 = vrot.slane %v353, 2
      %v355 = vmax.f32 %v353, %v354
      %v356 = vrot.slane %v355, 1
      %v357 = vmax.f32 %v355, %v356
      %v358 = vsel %vm252, %v249, -inf
      %v359 = vrot.slane %v358, 4
      %v360 = vmax.f32 %v358, %v359
      %v361 = vrot.slane %v360, 2
      %v362 = vmax.f32 %v360, %v361
      %v363 = vrot.slane %v362, 1
      %v364 = vmax.f32 %v362, %v363
      %v365 = vsub.f32 %v234, %v259
      %v366 = vsub.f32 %v235, %v266
      %v367 = vsub.f32 %v236, %v273
      %v368 = vsub.f32 %v237, %v280
      %v369 = vsub.f32 %v238, %v287
      %v370 = vsub.f32 %v239, %v294
      %v371 = vsub.f32 %v240, %v301
      %v372 = vsub.f32 %v241, %v308
      %v373 = vsub.f32 %v242, %v315
      %v374 = vsub.f32 %v243, %v322
      %v375 = vsub.f32 %v244, %v329
      %v376 = vsub.f32 %v245, %v336
      %v377 = vsub.f32 %v246, %v343
      %v378 = vsub.f32 %v247, %v350
      %v379 = vsub.f32 %v248, %v357
      %v380 = vsub.f32 %v249, %v364
      %v381 = vmul.f32 %v365, 1.442695
      %v382 = vpow.pop %v381
      %v383 = vmul.f32 %v366, 1.442695
      %v384 = vpow.pop %v383
      %v385 = vmul.f32 %v367, 1.442695
      %v386 = vpow.pop %v385
      %v387 = vmul.f32 %v368, 1.442695
      %v388 = vpow.pop %v387
      %v389 = vmul.f32 %v369, 1.442695
      %v390 = vpow.pop %v389
      %v391 = vmul.f32 %v370, 1.442695
      %v392 = vpow.pop %v391
      %v393 = vmul.f32 %v371, 1.442695
      %v394 = vpow.pop %v393
      %v395 = vmul.f32 %v372, 1.442695
      %v396 = vpow.pop %v395
      %v397 = vmul.f32 %v373, 1.442695
      %v398 = vpow.pop %v397
      %v399 = vmul.f32 %v374, 1.442695
      %v400 = vpow.pop %v399
      %v401 = vmul.f32 %v375, 1.442695
      %v402 = vpow.pop %v401
      %v403 = vmul.f32 %v376, 1.442695
      %v404 = vpow.pop %v403
      %v405 = vmul.f32 %v377, 1.442695
      %v406 = vpow.pop %v405
      %v407 = vmul.f32 %v378, 1.442695
      %v408 = vpow.pop %v407
      %v409 = vmul.f32 %v379, 1.442695
      %v410 = vpow.pop %v409
      %v411 = vmul.f32 %v380, 1.442695
      %v412 = vpow.pop %v411
      %v413 = vsel %vm252, %v382, 0.0
      %v414 = vrot.slane %v413, 4
      %v415 = vadd.f32 %v413, %v414
      %v416 = vrot.slane %v415, 2
      %v417 = vadd.f32 %v415, %v416
      %v418 = vrot.slane %v417, 1
      %v419 = vadd.f32 %v417, %v418
      %v420 = vsel %vm252, %v384, 0.0
      %v421 = vrot.slane %v420, 4
      %v422 = vadd.f32 %v420, %v421
      %v423 = vrot.slane %v422, 2
      %v424 = vadd.f32 %v422, %v423
      %v425 = vrot.slane %v424, 1
      %v426 = vadd.f32 %v424, %v425
      %v427 = vsel %vm252, %v386, 0.0
      %v428 = vrot.slane %v427, 4
      %v429 = vadd.f32 %v427, %v428
      %v430 = vrot.slane %v429, 2
      %v431 = vadd.f32 %v429, %v430
      %v432 = vrot.slane %v431, 1
      %v433 = vadd.f32 %v431, %v432
      %v434 = vsel %vm252, %v388, 0.0
      %v435 = vrot.slane %v434, 4
      %v436 = vadd.f32 %v434, %v435
      %v437 = vrot.slane %v436, 2
      %v438 = vadd.f32 %v436, %v437
      %v439 = vrot.slane %v438, 1
      %v440 = vadd.f32 %v438, %v439
      %v441 = vsel %vm252, %v390, 0.0
      %v442 = vrot.slane %v441, 4
      %v443 = vadd.f32 %v441, %v442
      %v444 = vrot.slane %v443, 2
      %v445 = vadd.f32 %v443, %v444
      %v446 = vrot.slane %v445, 1
      %v447 = vadd.f32 %v445, %v446
      %v448 = vsel %vm252, %v392, 0.0
      %v449 = vrot.slane %v448, 4
      %v450 = vadd.f32 %v448, %v449
      %v451 = vrot.slane %v450, 2
      %v452 = vadd.f32 %v450, %v451
      %v453 = vrot.slane %v452, 1
      %v454 = vadd.f32 %v452, %v453
      %v455 = vsel %vm252, %v394, 0.0
      %v456 = vrot.slane %v455, 4
      %v457 = vadd.f32 %v455, %v456
      %v458 = vrot.slane %v457, 2
      %v459 = vadd.f32 %v457, %v458
      %v460 = vrot.slane %v459, 1
      %v461 = vadd.f32 %v459, %v460
      %v462 = vsel %vm252, %v396, 0.0
      %v463 = vrot.slane %v462, 4
      %v464 = vadd.f32 %v462, %v463
      %v465 = vrot.slane %v464, 2
      %v466 = vadd.f32 %v464, %v465
      %v467 = vrot.slane %v466, 1
      %v468 = vadd.f32 %v466, %v467
      %v469 = vsel %vm252, %v398, 0.0
      %v470 = vrot.slane %v469, 4
      %v471 = vadd.f32 %v469, %v470
      %v472 = vrot.slane %v471, 2
      %v473 = vadd.f32 %v471, %v472
      %v474 = vrot.slane %v473, 1
      %v475 = vadd.f32 %v473, %v474
      %v476 = vsel %vm252, %v400, 0.0
      %v477 = vrot.slane %v476, 4
      %v478 = vadd.f32 %v476, %v477
      %v479 = vrot.slane %v478, 2
      %v480 = vadd.f32 %v478, %v479
      %v481 = vrot.slane %v480, 1
      %v482 = vadd.f32 %v480, %v481
      %v483 = vsel %vm252, %v402, 0.0
      %v484 = vrot.slane %v483, 4
      %v485 = vadd.f32 %v483, %v484
      %v486 = vrot.slane %v485, 2
      %v487 = vadd.f32 %v485, %v486
      %v488 = vrot.slane %v487, 1
      %v489 = vadd.f32 %v487, %v488
      %v490 = vsel %vm252, %v404, 0.0
      %v491 = vrot.slane %v490, 4
      %v492 = vadd.f32 %v490, %v491
      %v493 = vrot.slane %v492, 2
      %v494 = vadd.f32 %v492, %v493
      %v495 = vrot.slane %v494, 1
      %v496 = vadd.f32 %v494, %v495
      %v497 = vsel %vm252, %v406, 0.0
      %v498 = vrot.slane %v497, 4
      %v499 = vadd.f32 %v497, %v498
      %v500 = vrot.slane %v499, 2
      %v501 = vadd.f32 %v499, %v500
      %v502 = vrot.slane %v501, 1
      %v503 = vadd.f32 %v501, %v502
      %v504 = vsel %vm252, %v408, 0.0
      %v505 = vrot.slane %v504, 4
      %v506 = vadd.f32 %v504, %v505
      %v507 = vrot.slane %v506, 2
      %v508 = vadd.f32 %v506, %v507
      %v509 = vrot.slane %v508, 1
      %v510 = vadd.f32 %v508, %v509
      %v511 = vsel %vm252, %v410, 0.0
      %v512 = vrot.slane %v511, 4
      %v513 = vadd.f32 %v511, %v512
      %v514 = vrot.slane %v513, 2
      %v515 = vadd.f32 %v513, %v514
      %v516 = vrot.slane %v515, 1
      %v517 = vadd.f32 %v515, %v516
      %v518 = vsel %vm252, %v412, 0.0
      %v519 = vrot.slane %v518, 4
      %v520 = vadd.f32 %v518, %v519
      %v521 = vrot.slane %v520, 2
      %v522 = vadd.f32 %v520, %v521
      %v523 = vrot.slane %v522, 1
      %v524 = vadd.f32 %v522, %v523
      %v525 = vrcp.pop %v419
      %v526 = vrcp.pop %v426
      %v527 = vrcp.pop %v433
      %v528 = vrcp.pop %v440
      %v529 = vrcp.pop %v447
      %v530 = vrcp.pop %v454
      %v531 = vrcp.pop %v461
      %v532 = vrcp.pop %v468
      %v533 = vrcp.pop %v475
      %v534 = vrcp.pop %v482
      %v535 = vrcp.pop %v489
      %v536 = vrcp.pop %v496
      %v537 = vrcp.pop %v503
      %v538 = vrcp.pop %v510
      %v539 = vrcp.pop %v517
      %v540 = vrcp.pop %v524
      %v541 = vmul.f32 %v382, %v525
      %v542 = vmul.f32 %v384, %v526
      %v543 = vmul.f32 %v386, %v527
      %v544 = vmul.f32 %v388, %v528
      %v545 = vmul.f32 %v390, %v529
      %v546 = vmul.f32 %v392, %v530
      %v547 = vmul.f32 %v394, %v531
      %v548 = vmul.f32 %v396, %v532
      %v549 = vmul.f32 %v398, %v533
      %v550 = vmul.f32 %v400, %v534
      %v551 = vmul.f32 %v402, %v535
      %v552 = vmul.f32 %v404, %v536
      %v553 = vmul.f32 %v406, %v537
      %v554 = vmul.f32 %v408, %v538
      %v555 = vmul.f32 %v410, %v539
      %v556 = vmul.f32 %v412, %v540
      %v557 = vlaneseq
      %v558 = vshrl.u32 %v557, 7
      %v559 = vlaneseq
      %v560 = vshrl.u32 %v559, 7
      %v561 = vsub.s32 0, %v560
      %v562 = vrot.slane %v250, %v561
      %v563 = vlaneseq
      %v564 = vshrl.u32 %v563, 7
      %v565 = vsub.s32 1, %v564
      %v566 = vrot.slane %v250, %v565
      %v567 = vlaneseq
      %v568 = vshrl.u32 %v567, 7
      %v569 = vsub.s32 2, %v568
      %v570 = vrot.slane %v250, %v569
      %v571 = vlaneseq
      %v572 = vshrl.u32 %v571, 7
      %v573 = vsub.s32 3, %v572
      %v574 = vrot.slane %v250, %v573
      %v575 = vlaneseq
      %v576 = vshrl.u32 %v575, 7
      %v577 = vsub.s32 4, %v576
      %v578 = vrot.slane %v250, %v577
      %v579 = vlaneseq
      %v580 = vshrl.u32 %v579, 7
      %v581 = vsub.s32 5, %v580
      %v582 = vrot.slane %v250, %v581
      %v583 = vlaneseq
      %v584 = vshrl.u32 %v583, 7
      %v585 = vsub.s32 6, %v584
      %v586 = vrot.slane %v250, %v585
      %v587 = vlaneseq
      %v588 = vshrl.u32 %v587, 7
      %v589 = vsub.s32 7, %v588
      %v590 = vrot.slane %v250, %v589
      %v591 = vlaneseq
      %v592 = vshrl.u32 %v591, 7
      %v593 = vsub.s32 0, %v592
      %v594 = vrot.slane %v251, %v593
      %v595 = vlaneseq
      %v596 = vshrl.u32 %v595, 7
      %v597 = vsub.s32 1, %v596
      %v598 = vrot.slane %v251, %v597
      %v599 = vlaneseq
      %v600 = vshrl.u32 %v599, 7
      %v601 = vsub.s32 2, %v600
      %v602 = vrot.slane %v251, %v601
      %v603 = vlaneseq
      %v604 = vshrl.u32 %v603, 7
      %v605 = vsub.s32 3, %v604
      %v606 = vrot.slane %v251, %v605
      %v607 = vlaneseq
      %v608 = vshrl.u32 %v607, 7
      %v609 = vsub.s32 4, %v608
      %v610 = vrot.slane %v251, %v609
      %v611 = vlaneseq
      %v612 = vshrl.u32 %v611, 7
      %v613 = vsub.s32 5, %v612
      %v614 = vrot.slane %v251, %v613
      %v615 = vlaneseq
      %v616 = vshrl.u32 %v615, 7
      %v617 = vsub.s32 6, %v616
      %v618 = vrot.slane %v251, %v617
      %v619 = vlaneseq
      %v620 = vshrl.u32 %v619, 7
      %v621 = vsub.s32 7, %v620
      %v622 = vrot.slane %v251, %v621
      %vm623 = vcmp.eq.s32.totalorder %v558, %v562
      %vm624 = vcmp.eq.s32.totalorder %v558, %v566
      %vm625 = vcmp.eq.s32.totalorder %v558, %v570
      %vm626 = vcmp.eq.s32.totalorder %v558, %v574
      %vm627 = vcmp.eq.s32.totalorder %v558, %v578
      %vm628 = vcmp.eq.s32.totalorder %v558, %v582
      %vm629 = vcmp.eq.s32.totalorder %v558, %v586
      %vm630 = vcmp.eq.s32.totalorder %v558, %v590
      %vm631 = vcmp.eq.s32.totalorder %v558, %v594
      %vm632 = vcmp.eq.s32.totalorder %v558, %v598
      %vm633 = vcmp.eq.s32.totalorder %v558, %v602
      %vm634 = vcmp.eq.s32.totalorder %v558, %v606
      %vm635 = vcmp.eq.s32.totalorder %v558, %v610
      %vm636 = vcmp.eq.s32.totalorder %v558, %v614
      %vm637 = vcmp.eq.s32.totalorder %v558, %v618
      %vm638 = vcmp.eq.s32.totalorder %v558, %v622
      %v639 = vsel %vm623, 1, 0
      %v640 = vsel %vm624, 1, 0
      %v641 = vsel %vm625, 1, 0
      %v642 = vsel %vm626, 1, 0
      %v643 = vsel %vm627, 1, 0
      %v644 = vsel %vm628, 1, 0
      %v645 = vsel %vm629, 1, 0
      %v646 = vsel %vm630, 1, 0
      %v647 = vsel %vm631, 1, 0
      %v648 = vsel %vm632, 1, 0
      %v649 = vsel %vm633, 1, 0
      %v650 = vsel %vm634, 1, 0
      %v651 = vsel %vm635, 1, 0
      %v652 = vsel %vm636, 1, 0
      %v653 = vsel %vm637, 1, 0
      %v654 = vsel %vm638, 1, 0
      %v655 = vcvt.s32.f32 %v639
      %v656 = vcvt.s32.f32 %v640
      %v657 = vcvt.s32.f32 %v641
      %v658 = vcvt.s32.f32 %v642
      %v659 = vcvt.s32.f32 %v643
      %v660 = vcvt.s32.f32 %v644
      %v661 = vcvt.s32.f32 %v645
      %v662 = vcvt.s32.f32 %v646
      %v663 = vcvt.s32.f32 %v647
      %v664 = vcvt.s32.f32 %v648
      %v665 = vcvt.s32.f32 %v649
      %v666 = vcvt.s32.f32 %v650
      %v667 = vcvt.s32.f32 %v651
      %v668 = vcvt.s32.f32 %v652
      %v669 = vcvt.s32.f32 %v653
      %v670 = vcvt.s32.f32 %v654
      %v671 = vsel %vm252, %v655, 0.0
      %v672 = vsel %vm252, %v656, 0.0
      %v673 = vadd.f32 %v671, %v672
      %v674 = vsel %vm252, %v657, 0.0
      %v675 = vadd.f32 %v673, %v674
      %v676 = vsel %vm252, %v658, 0.0
      %v677 = vadd.f32 %v675, %v676
      %v678 = vsel %vm252, %v659, 0.0
      %v679 = vadd.f32 %v677, %v678
      %v680 = vsel %vm252, %v660, 0.0
      %v681 = vadd.f32 %v679, %v680
      %v682 = vsel %vm252, %v661, 0.0
      %v683 = vadd.f32 %v681, %v682
      %v684 = vsel %vm252, %v662, 0.0
      %v685 = vadd.f32 %v683, %v684
      %v686 = vsel %vm252, %v663, 0.0
      %v687 = vadd.f32 %v685, %v686
      %v688 = vsel %vm252, %v664, 0.0
      %v689 = vadd.f32 %v687, %v688
      %v690 = vsel %vm252, %v665, 0.0
      %v691 = vadd.f32 %v689, %v690
      %v692 = vsel %vm252, %v666, 0.0
      %v693 = vadd.f32 %v691, %v692
      %v694 = vsel %vm252, %v667, 0.0
      %v695 = vadd.f32 %v693, %v694
      %v696 = vsel %vm252, %v668, 0.0
      %v697 = vadd.f32 %v695, %v696
      %v698 = vsel %vm252, %v669, 0.0
      %v699 = vadd.f32 %v697, %v698
      %v700 = vsel %vm252, %v670, 0.0
      %v701 = vadd.f32 %v699, %v700
      %702 = vadd.xlane.f32.xlu0 %v701
      %v703 = vpop.xlane.xlu0 %702
      %v704 = vsel %vm623, %v541, 0.0
      %v705 = vsel %vm624, %v542, 0.0
      %v706 = vsel %vm625, %v543, 0.0
      %v707 = vsel %vm626, %v544, 0.0
      %v708 = vsel %vm627, %v545, 0.0
      %v709 = vsel %vm628, %v546, 0.0
      %v710 = vsel %vm629, %v547, 0.0
      %v711 = vsel %vm630, %v548, 0.0
      %v712 = vsel %vm631, %v549, 0.0
      %v713 = vsel %vm632, %v550, 0.0
      %v714 = vsel %vm633, %v551, 0.0
      %v715 = vsel %vm634, %v552, 0.0
      %v716 = vsel %vm635, %v553, 0.0
      %v717 = vsel %vm636, %v554, 0.0
      %v718 = vsel %vm637, %v555, 0.0
      %v719 = vsel %vm638, %v556, 0.0
      %v720 = vsel %vm252, %v704, 0.0
      %v721 = vsel %vm252, %v705, 0.0
      %v722 = vadd.f32 %v720, %v721
      %v723 = vsel %vm252, %v706, 0.0
      %v724 = vadd.f32 %v722, %v723
      %v725 = vsel %vm252, %v707, 0.0
      %v726 = vadd.f32 %v724, %v725
      %v727 = vsel %vm252, %v708, 0.0
      %v728 = vadd.f32 %v726, %v727
      %v729 = vsel %vm252, %v709, 0.0
      %v730 = vadd.f32 %v728, %v729
      %v731 = vsel %vm252, %v710, 0.0
      %v732 = vadd.f32 %v730, %v731
      %v733 = vsel %vm252, %v711, 0.0
      %v734 = vadd.f32 %v732, %v733
      %v735 = vsel %vm252, %v712, 0.0
      %v736 = vadd.f32 %v734, %v735
      %v737 = vsel %vm252, %v713, 0.0
      %v738 = vadd.f32 %v736, %v737
      %v739 = vsel %vm252, %v714, 0.0
      %v740 = vadd.f32 %v738, %v739
      %v741 = vsel %vm252, %v715, 0.0
      %v742 = vadd.f32 %v740, %v741
      %v743 = vsel %vm252, %v716, 0.0
      %v744 = vadd.f32 %v742, %v743
      %v745 = vsel %vm252, %v717, 0.0
      %v746 = vadd.f32 %v744, %v745
      %v747 = vsel %vm252, %v718, 0.0
      %v748 = vadd.f32 %v746, %v747
      %v749 = vsel %vm252, %v719, 0.0
      %v750 = vadd.f32 %v748, %v749
      %751 = vadd.xlane.f32.xlu0 %v750
      %v752 = vpop.xlane.xlu0 %751
      %v753 = vsel %vm252, %v541, 0.0
      %v754 = vsel %vm252, %v542, 0.0
      %v755 = vadd.f32 %v753, %v754
      %v756 = vsel %vm252, %v543, 0.0
      %v757 = vadd.f32 %v755, %v756
      %v758 = vsel %vm252, %v544, 0.0
      %v759 = vadd.f32 %v757, %v758
      %v760 = vsel %vm252, %v545, 0.0
      %v761 = vadd.f32 %v759, %v760
      %v762 = vsel %vm252, %v546, 0.0
      %v763 = vadd.f32 %v761, %v762
      %v764 = vsel %vm252, %v547, 0.0
      %v765 = vadd.f32 %v763, %v764
      %v766 = vsel %vm252, %v548, 0.0
      %v767 = vadd.f32 %v765, %v766
      %v768 = vsel %vm252, %v549, 0.0
      %v769 = vadd.f32 %v767, %v768
      %v770 = vsel %vm252, %v550, 0.0
      %v771 = vadd.f32 %v769, %v770
      %v772 = vsel %vm252, %v551, 0.0
      %v773 = vadd.f32 %v771, %v772
      %v774 = vsel %vm252, %v552, 0.0
      %v775 = vadd.f32 %v773, %v774
      %v776 = vsel %vm252, %v553, 0.0
      %v777 = vadd.f32 %v775, %v776
      %v778 = vsel %vm252, %v554, 0.0
      %v779 = vadd.f32 %v777, %v778
      %v780 = vsel %vm252, %v555, 0.0
      %v781 = vadd.f32 %v779, %v780
      %v782 = vsel %vm252, %v556, 0.0
      %v783 = vadd.f32 %v781, %v782
      %784 = vadd.xlane.f32.xlu0 %v783
      %v785 = vpop.xlane.xlu0 %784
      %vm786 = vcmp.gt.f32.partialorder %v541, 0.5
      %vm787 = vcmp.gt.f32.partialorder %v542, 0.5
      %vm788 = vcmp.gt.f32.partialorder %v543, 0.5
      %vm789 = vcmp.gt.f32.partialorder %v544, 0.5
      %vm790 = vcmp.gt.f32.partialorder %v545, 0.5
      %vm791 = vcmp.gt.f32.partialorder %v546, 0.5
      %vm792 = vcmp.gt.f32.partialorder %v547, 0.5
      %vm793 = vcmp.gt.f32.partialorder %v548, 0.5
      %vm794 = vcmp.gt.f32.partialorder %v549, 0.5
      %vm795 = vcmp.gt.f32.partialorder %v550, 0.5
      %vm796 = vcmp.gt.f32.partialorder %v551, 0.5
      %vm797 = vcmp.gt.f32.partialorder %v552, 0.5
      %vm798 = vcmp.gt.f32.partialorder %v553, 0.5
      %vm799 = vcmp.gt.f32.partialorder %v554, 0.5
      %vm800 = vcmp.gt.f32.partialorder %v555, 0.5
      %vm801 = vcmp.gt.f32.partialorder %v556, 0.5
      %v802 = vsel %vm786, 1, 0
      %v803 = vsel %vm787, 1, 0
      %v804 = vsel %vm788, 1, 0
      %v805 = vsel %vm789, 1, 0
      %v806 = vsel %vm790, 1, 0
      %v807 = vsel %vm791, 1, 0
      %v808 = vsel %vm792, 1, 0
      %v809 = vsel %vm793, 1, 0
      %v810 = vsel %vm794, 1, 0
      %v811 = vsel %vm795, 1, 0
      %v812 = vsel %vm796, 1, 0
      %v813 = vsel %vm797, 1, 0
      %v814 = vsel %vm798, 1, 0
      %v815 = vsel %vm799, 1, 0
      %v816 = vsel %vm800, 1, 0
      %v817 = vsel %vm801, 1, 0
      %v818 = vcvt.s32.f32 %v802
      %v819 = vcvt.s32.f32 %v803
      %v820 = vcvt.s32.f32 %v804
      %v821 = vcvt.s32.f32 %v805
      %v822 = vcvt.s32.f32 %v806
      %v823 = vcvt.s32.f32 %v807
      %v824 = vcvt.s32.f32 %v808
      %v825 = vcvt.s32.f32 %v809
      %v826 = vcvt.s32.f32 %v810
      %v827 = vcvt.s32.f32 %v811
      %v828 = vcvt.s32.f32 %v812
      %v829 = vcvt.s32.f32 %v813
      %v830 = vcvt.s32.f32 %v814
      %v831 = vcvt.s32.f32 %v815
      %v832 = vcvt.s32.f32 %v816
      %v833 = vcvt.s32.f32 %v817
      %v834 = vsel %vm252, %v818, 0.0
      %v835 = vsel %vm252, %v819, 0.0
      %v836 = vadd.f32 %v834, %v835
      %v837 = vsel %vm252, %v820, 0.0
      %v838 = vadd.f32 %v836, %v837
      %v839 = vsel %vm252, %v821, 0.0
      %v840 = vadd.f32 %v838, %v839
      %v841 = vsel %vm252, %v822, 0.0
      %v842 = vadd.f32 %v840, %v841
      %v843 = vsel %vm252, %v823, 0.0
      %v844 = vadd.f32 %v842, %v843
      %v845 = vsel %vm252, %v824, 0.0
      %v846 = vadd.f32 %v844, %v845
      %v847 = vsel %vm252, %v825, 0.0
      %v848 = vadd.f32 %v846, %v847
      %v849 = vsel %vm252, %v826, 0.0
      %v850 = vadd.f32 %v848, %v849
      %v851 = vsel %vm252, %v827, 0.0
      %v852 = vadd.f32 %v850, %v851
      %v853 = vsel %vm252, %v828, 0.0
      %v854 = vadd.f32 %v852, %v853
      %v855 = vsel %vm252, %v829, 0.0
      %v856 = vadd.f32 %v854, %v855
      %v857 = vsel %vm252, %v830, 0.0
      %v858 = vadd.f32 %v856, %v857
      %v859 = vsel %vm252, %v831, 0.0
      %v860 = vadd.f32 %v858, %v859
      %v861 = vsel %vm252, %v832, 0.0
      %v862 = vadd.f32 %v860, %v861
      %v863 = vsel %vm252, %v833, 0.0
      %v864 = vadd.f32 %v862, %v863
      %865 = vadd.xlane.f32.xlu0 %v864
      %v866 = vpop.xlane.xlu0 %865
      %v867 = vlog2.pop %v419
      %v868 = vmul.f32 %v867, 0.6931472
      %v869 = vlog2.pop %v426
      %v870 = vmul.f32 %v869, 0.6931472
      %v871 = vlog2.pop %v433
      %v872 = vmul.f32 %v871, 0.6931472
      %v873 = vlog2.pop %v440
      %v874 = vmul.f32 %v873, 0.6931472
      %v875 = vlog2.pop %v447
      %v876 = vmul.f32 %v875, 0.6931472
      %v877 = vlog2.pop %v454
      %v878 = vmul.f32 %v877, 0.6931472
      %v879 = vlog2.pop %v461
      %v880 = vmul.f32 %v879, 0.6931472
      %v881 = vlog2.pop %v468
      %v882 = vmul.f32 %v881, 0.6931472
      %v883 = vlog2.pop %v475
      %v884 = vmul.f32 %v883, 0.6931472
      %v885 = vlog2.pop %v482
      %v886 = vmul.f32 %v885, 0.6931472
      %v887 = vlog2.pop %v489
      %v888 = vmul.f32 %v887, 0.6931472
      %v889 = vlog2.pop %v496
      %v890 = vmul.f32 %v889, 0.6931472
      %v891 = vlog2.pop %v503
      %v892 = vmul.f32 %v891, 0.6931472
      %v893 = vlog2.pop %v510
      %v894 = vmul.f32 %v893, 0.6931472
      %v895 = vlog2.pop %v517
      %v896 = vmul.f32 %v895, 0.6931472
      %v897 = vlog2.pop %v524
      %v898 = vmul.f32 %v897, 0.6931472
      %v899 = vadd.f32 %v259, %v868
      %v900 = vadd.f32 %v266, %v870
      %v901 = vadd.f32 %v273, %v872
      %v902 = vadd.f32 %v280, %v874
      %v903 = vadd.f32 %v287, %v876
      %v904 = vadd.f32 %v294, %v878
      %v905 = vadd.f32 %v301, %v880
      %v906 = vadd.f32 %v308, %v882
      %v907 = vadd.f32 %v315, %v884
      %v908 = vadd.f32 %v322, %v886
      %v909 = vadd.f32 %v329, %v888
      %v910 = vadd.f32 %v336, %v890
      %v911 = vadd.f32 %v343, %v892
      %v912 = vadd.f32 %v350, %v894
      %v913 = vadd.f32 %v357, %v896
      %v914 = vadd.f32 %v364, %v898
      %v915 = vsel %vm623, %v234, 0.0
      %v916 = vsel %vm624, %v235, 0.0
      %v917 = vsel %vm625, %v236, 0.0
      %v918 = vsel %vm626, %v237, 0.0
      %v919 = vsel %vm627, %v238, 0.0
      %v920 = vsel %vm628, %v239, 0.0
      %v921 = vsel %vm629, %v240, 0.0
      %v922 = vsel %vm630, %v241, 0.0
      %v923 = vsel %vm631, %v242, 0.0
      %v924 = vsel %vm632, %v243, 0.0
      %v925 = vsel %vm633, %v244, 0.0
      %v926 = vsel %vm634, %v245, 0.0
      %v927 = vsel %vm635, %v246, 0.0
      %v928 = vsel %vm636, %v247, 0.0
      %v929 = vsel %vm637, %v248, 0.0
      %v930 = vsel %vm638, %v249, 0.0
      %v931 = vsel %vm252, %v915, 0.0
      %v932 = vrot.slane %v931, 4
      %v933 = vadd.f32 %v931, %v932
      %v934 = vrot.slane %v933, 2
      %v935 = vadd.f32 %v933, %v934
      %v936 = vrot.slane %v935, 1
      %v937 = vadd.f32 %v935, %v936
      %v938 = vsel %vm252, %v916, 0.0
      %v939 = vrot.slane %v938, 4
      %v940 = vadd.f32 %v938, %v939
      %v941 = vrot.slane %v940, 2
      %v942 = vadd.f32 %v940, %v941
      %v943 = vrot.slane %v942, 1
      %v944 = vadd.f32 %v942, %v943
      %v945 = vsel %vm252, %v917, 0.0
      %v946 = vrot.slane %v945, 4
      %v947 = vadd.f32 %v945, %v946
      %v948 = vrot.slane %v947, 2
      %v949 = vadd.f32 %v947, %v948
      %v950 = vrot.slane %v949, 1
      %v951 = vadd.f32 %v949, %v950
      %v952 = vsel %vm252, %v918, 0.0
      %v953 = vrot.slane %v952, 4
      %v954 = vadd.f32 %v952, %v953
      %v955 = vrot.slane %v954, 2
      %v956 = vadd.f32 %v954, %v955
      %v957 = vrot.slane %v956, 1
      %v958 = vadd.f32 %v956, %v957
      %v959 = vsel %vm252, %v919, 0.0
      %v960 = vrot.slane %v959, 4
      %v961 = vadd.f32 %v959, %v960
      %v962 = vrot.slane %v961, 2
      %v963 = vadd.f32 %v961, %v962
      %v964 = vrot.slane %v963, 1
      %v965 = vadd.f32 %v963, %v964
      %v966 = vsel %vm252, %v920, 0.0
      %v967 = vrot.slane %v966, 4
      %v968 = vadd.f32 %v966, %v967
      %v969 = vrot.slane %v968, 2
      %v970 = vadd.f32 %v968, %v969
      %v971 = vrot.slane %v970, 1
      %v972 = vadd.f32 %v970, %v971
      %v973 = vsel %vm252, %v921, 0.0
      %v974 = vrot.slane %v973, 4
      %v975 = vadd.f32 %v973, %v974
      %v976 = vrot.slane %v975, 2
      %v977 = vadd.f32 %v975, %v976
      %v978 = vrot.slane %v977, 1
      %v979 = vadd.f32 %v977, %v978
      %v980 = vsel %vm252, %v922, 0.0
      %v981 = vrot.slane %v980, 4
      %v982 = vadd.f32 %v980, %v981
      %v983 = vrot.slane %v982, 2
      %v984 = vadd.f32 %v982, %v983
      %v985 = vrot.slane %v984, 1
      %v986 = vadd.f32 %v984, %v985
      %v987 = vsel %vm252, %v923, 0.0
      %v988 = vrot.slane %v987, 4
      %v989 = vadd.f32 %v987, %v988
      %v990 = vrot.slane %v989, 2
      %v991 = vadd.f32 %v989, %v990
      %v992 = vrot.slane %v991, 1
      %v993 = vadd.f32 %v991, %v992
      %v994 = vsel %vm252, %v924, 0.0
      %v995 = vrot.slane %v994, 4
      %v996 = vadd.f32 %v994, %v995
      %v997 = vrot.slane %v996, 2
      %v998 = vadd.f32 %v996, %v997
      %v999 = vrot.slane %v998, 1
      %v1000 = vadd.f32 %v998, %v999
      %v1001 = vsel %vm252, %v925, 0.0
      %v1002 = vrot.slane %v1001, 4
      %v1003 = vadd.f32 %v1001, %v1002
      %v1004 = vrot.slane %v1003, 2
      %v1005 = vadd.f32 %v1003, %v1004
      %v1006 = vrot.slane %v1005, 1
      %v1007 = vadd.f32 %v1005, %v1006
      %v1008 = vsel %vm252, %v926, 0.0
      %v1009 = vrot.slane %v1008, 4
      %v1010 = vadd.f32 %v1008, %v1009
      %v1011 = vrot.slane %v1010, 2
      %v1012 = vadd.f32 %v1010, %v1011
      %v1013 = vrot.slane %v1012, 1
      %v1014 = vadd.f32 %v1012, %v1013
      %v1015 = vsel %vm252, %v927, 0.0
      %v1016 = vrot.slane %v1015, 4
      %v1017 = vadd.f32 %v1015, %v1016
      %v1018 = vrot.slane %v1017, 2
      %v1019 = vadd.f32 %v1017, %v1018
      %v1020 = vrot.slane %v1019, 1
      %v1021 = vadd.f32 %v1019, %v1020
      %v1022 = vsel %vm252, %v928, 0.0
      %v1023 = vrot.slane %v1022, 4
      %v1024 = vadd.f32 %v1022, %v1023
      %v1025 = vrot.slane %v1024, 2
      %v1026 = vadd.f32 %v1024, %v1025
      %v1027 = vrot.slane %v1026, 1
      %v1028 = vadd.f32 %v1026, %v1027
      %v1029 = vsel %vm252, %v929, 0.0
      %v1030 = vrot.slane %v1029, 4
      %v1031 = vadd.f32 %v1029, %v1030
      %v1032 = vrot.slane %v1031, 2
      %v1033 = vadd.f32 %v1031, %v1032
      %v1034 = vrot.slane %v1033, 1
      %v1035 = vadd.f32 %v1033, %v1034
      %v1036 = vsel %vm252, %v930, 0.0
      %v1037 = vrot.slane %v1036, 4
      %v1038 = vadd.f32 %v1036, %v1037
      %v1039 = vrot.slane %v1038, 2
      %v1040 = vadd.f32 %v1038, %v1039
      %v1041 = vrot.slane %v1040, 1
      %v1042 = vadd.f32 %v1040, %v1041
      %v1043 = vsub.f32 %v899, %v937
      %v1044 = vsub.f32 %v900, %v944
      %v1045 = vsub.f32 %v901, %v951
      %v1046 = vsub.f32 %v902, %v958
      %v1047 = vsub.f32 %v903, %v965
      %v1048 = vsub.f32 %v904, %v972
      %v1049 = vsub.f32 %v905, %v979
      %v1050 = vsub.f32 %v906, %v986
      %v1051 = vsub.f32 %v907, %v993
      %v1052 = vsub.f32 %v908, %v1000
      %v1053 = vsub.f32 %v909, %v1007
      %v1054 = vsub.f32 %v910, %v1014
      %v1055 = vsub.f32 %v911, %v1021
      %v1056 = vsub.f32 %v912, %v1028
      %v1057 = vsub.f32 %v913, %v1035
      %v1058 = vsub.f32 %v914, %v1042
      %v1059 = vadd.f32 %v1043, %v1044
      %v1060 = vadd.f32 %v1059, %v1045
      %v1061 = vadd.f32 %v1060, %v1046
      %v1062 = vadd.f32 %v1061, %v1047
      %v1063 = vadd.f32 %v1062, %v1048
      %v1064 = vadd.f32 %v1063, %v1049
      %v1065 = vadd.f32 %v1064, %v1050
      %v1066 = vadd.f32 %v1065, %v1051
      %v1067 = vadd.f32 %v1066, %v1052
      %v1068 = vadd.f32 %v1067, %v1053
      %v1069 = vadd.f32 %v1068, %v1054
      %v1070 = vadd.f32 %v1069, %v1055
      %v1071 = vadd.f32 %v1070, %v1056
      %v1072 = vadd.f32 %v1071, %v1057
      %v1073 = vadd.f32 %v1072, %v1058
      %1074 = vadd.xlane.f32.xlu0 %v1073
      %v1075 = vpop.xlane.xlu0 %1074
      %v1076 = vlaneseq
      %v1077 = vand.u32 %v1076, 127
      %vm1078 = vcmp.eq.s32.totalorder %v1077, 0
      %v1079 = vsel %vm1078, 1, 0
      %vm1080 = vcmp.eq.s32.totalorder %v1079, 1
      %v1081 = vsel %vm1080, %v703, 0.0
      %vm1082 = vcmp.eq.s32.totalorder %v1077, 1
      %v1083 = vsel %vm1082, 1, 0
      %vm1084 = vcmp.eq.s32.totalorder %v1083, 1
      %v1085 = vsel %vm1084, %v752, 0.0
      %v1086 = vadd.f32 %v1081, %v1085
      %vm1087 = vcmp.eq.s32.totalorder %v1077, 2
      %v1088 = vsel %vm1087, 1, 0
      %vm1089 = vcmp.eq.s32.totalorder %v1088, 1
      %v1090 = vsel %vm1089, %v785, 0.0
      %v1091 = vadd.f32 %v1086, %v1090
      %vm1092 = vcmp.eq.s32.totalorder %v1077, 3
      %v1093 = vsel %vm1092, %v1075, 0.0
      %v1094 = vadd.f32 %v1091, %v1093
      %vm1095 = vcmp.eq.s32.totalorder %v1077, 4
      %v1096 = vsel %vm1095, 1, 0
      %vm1097 = vcmp.eq.s32.totalorder %v1096, 1
      %v1098 = vsel %vm1097, %v866, 0.0
      %v1099 = vadd.f32 %v1094, %v1098
      %v1100 = vld [vmem:[%s227] sm:$0x1f]
      %v1101 = vadd.f32 %v1100, %v1099
      %1102 = vst [vmem:[%s227] sm:$0x1f] %v1101
      %s1103 = sadd.s32 %s18, %s19
      %p1104 = scmp.lt.s32.totalorder %s1103, 1
      %s1105 = scalar_select %p1104, %s1103, 1
      %s1106 = smul.addr %s1105, 8
      %s1107 = scalar_lea.vmem %s2, %s1106
      // Predicated region
      $region33: #{a_call__.1} parent=27 // pred_check
        %p1108 = pneg %p112
      $region34: #{a_call__.1} parent=27 // pred_check_branch
        %1110 = sbr.rel (%p1108) target = $region36
      $region35: #{a_call__.1} parent=27 // pred_region
        %s1111 = sadd.s32 %s18, %s19
      $region36: #{a_call__.1} parent=27 // pred_fallthru
        _
    $region28: #{a_call__.1} parent=5 // pred_fallthru
      _
    %p1112 = scmp.le.s32.totalorder 2, %s8
    // Predicated region
    $region37: #{a_call__.1} parent=5 // pred_check
      %p1113 = pneg %p1112
    $region38: #{a_call__.1} parent=5 // pred_check_branch
      %1115 = sbr.rel (%p1113) target = $region40
    $region39: #{a_call__.1} parent=5 // pred_region
      %s1116 = ssub.s32 %s8, 2
      // Predicated region
      $region41: #{a_call__.1} parent=39 // pred_check
        %p1117 = pneg %p118
      $region42: #{a_call__.1} parent=39 // pred_check_branch
        %1119 = sbr.rel (%p1117) target = $region44
      $region43: #{a_call__.1} parent=39 // pred_region
        %s1120 = sadd.s32 %s21, %s22
        %p1121 = scmp.lt.s32.totalorder %s1120, 1
        %s1122 = scalar_select %p1121, %s1120, 1
        %s1123 = smul.addr %s1122, 8
        %s1124 = scalar_lea.vmem %s2, %s1123
      $region44: #{a_call__.1} parent=39 // pred_fallthru
        _
    $region40: #{a_call__.1} parent=5 // pred_fallthru
      _
  $region6: #{a_call__.1} parent=0 // loop_footer
    %s12 = sadd.s32 1, %s8
  $region7: #{a_call__.1} parent=0 // loop_footer_branch
    %7 = sbr.rel target = $region3
  $region8: #{a_call__.1} parent=0 // loop_exit
    _

</llo_original>
